<compile_context>
chip_gen: v6e
topology: v6e:2x2x1
jax: 0.10.0
libtpu: 0.0.40
codegen_flags: <defaults>
</compile_context>

<pallas_src>
import jax
import jax.numpy as jnp
from jax.experimental import pallas as pl
from jax.experimental.pallas import tpu as pltpu

LN_EPS = 1e-5  # torch.nn.LayerNorm default


def _plddt_kernel(s_ref, g_ref, b_ref,
                  w1_ref, b1_ref, w2_ref, b2_ref, w3_ref, b3_ref,
                  o_ref):
    # MXU compute dtype == parameter dtype (bf16 runs at full MXU rate);
    # accumulation is always f32 via preferred_element_type.
    cdt = w1_ref.dtype

    # --- LayerNorm over the channel (last) axis, statistics in f32 ----------
    x = s_ref[...].astype(jnp.float32)                        # (tm, c_in)
    mean = jnp.mean(x, axis=-1, keepdims=True)
    centered = x - mean
    var = jnp.mean(centered * centered, axis=-1, keepdims=True)
    xn = centered * jax.lax.rsqrt(var + LN_EPS)
    xn = xn * g_ref[...].astype(jnp.float32) + b_ref[...].astype(jnp.float32)

    # --- Linear 1 + ReLU -----------------------------------------------------
    h = jnp.dot(xn.astype(cdt), w1_ref[...],
                preferred_element_type=jnp.float32)
    h = jnp.maximum(h + b1_ref[...].astype(jnp.float32), 0.0)

    # --- Linear 2 + ReLU -----------------------------------------------------
    h = jnp.dot(h.astype(cdt), w2_ref[...],
                preferred_element_type=jnp.float32)
    h = jnp.maximum(h + b2_ref[...].astype(jnp.float32), 0.0)

    # --- Linear 3 (logits, lane-padded to a multiple of 128) -----------------
    o = jnp.dot(h.astype(cdt), w3_ref[...],
                preferred_element_type=jnp.float32) + b3_ref[...].astype(jnp.float32)

    o_ref[...] = o.astype(o_ref.dtype)


def _round_up(x, m):
    return ((x + m - 1) // m) * m


def per_residue_lddt_ca_predictor(s, params, *, tm=1024):
    """s: [..., c_in]  ->  [..., no_bins]"""
    c_in = s.shape[-1]
    lead_shape = s.shape[:-1]
    n = 1
    for d in lead_shape:
        n *= d
    s2 = s.reshape(n, c_in)

    gamma, beta = params["ln_g"], params["ln_b"]
    w1, b1 = params["w1"], params["b1"]          # w*: [in, out] (pre-transposed)
    w2, b2 = params["w2"], params["b2"]
    w3, b3 = params["w3"], params["b3"]
    c_hidden = w1.shape[1]
    no_bins = w3.shape[1]

    # Lane-dense output: pad the final weight/bias (and output) to a multiple
    # of 128 columns so the writeback uses full, unmasked vector stores.
    nb_pad = _round_up(no_bins, 128)
    if nb_pad != no_bins:
        w3p = jnp.pad(w3, ((0, 0), (0, nb_pad - no_bins)))
        b3p = jnp.pad(b3, ((0, 0), (0, nb_pad - no_bins)))
    else:
        w3p, b3p = w3, b3

    # Row tile: large (amortizes per-step overhead, keeps the MXU M-dim deep),
    # but capped so the grid keeps >= 2 steps (v7x has 2 TensorCores) and
    # aligned to the sublane packing of the input dtype.
    row_align = {4: 8, 2: 16, 1: 32}.get(jnp.dtype(s.dtype).itemsize, 8)
    half = _round_up(pl.cdiv(n, 2), row_align)
    tm_eff = max(row_align, min(tm, half))

    # Pad rows to a multiple of the tile; padded (zero) rows are harmless
    # through LN/matmuls (var + eps > 0, no NaNs) and are sliced off below.
    n_pad = _round_up(n, tm_eff)
    if n_pad != n:
        s2 = jnp.pad(s2, ((0, n_pad - n), (0, 0)))
    grid = (n_pad // tm_eff,)

    row_spec_in = pl.BlockSpec((tm_eff, c_in), lambda i: (i, 0))
    row_spec_out = pl.BlockSpec((tm_eff, nb_pad), lambda i: (i, 0))
    # Constant index map -> block stays resident in VMEM across grid steps.
    full = lambda shape: pl.BlockSpec(shape, lambda i: (0,) * len(shape))

    out = pl.pallas_call(
        _plddt_kernel,
        out_shape=jax.ShapeDtypeStruct((n_pad, nb_pad), s.dtype),
        grid_spec=pltpu.PrefetchScalarGridSpec(
            num_scalar_prefetch=0,
            grid=grid,
            in_specs=[
                row_spec_in,                       # s rows
                full((1, c_in)),                   # ln gamma
                full((1, c_in)),                   # ln beta
                full((c_in, c_hidden)),            # w1
                full((1, c_hidden)),               # b1
                full((c_hidden, c_hidden)),        # w2
                full((1, c_hidden)),               # b2
                full((c_hidden, nb_pad)),          # w3 (lane-padded)
                full((1, nb_pad)),                 # b3 (lane-padded)
            ],
            out_specs=row_spec_out,
        ),
        compiler_params=pltpu.CompilerParams(
            dimension_semantics=("parallel",),
            vmem_limit_bytes=32 * 1024 * 1024,
        ),
    )(s2, gamma, beta, w1, b1, w2, b2, w3p, b3p)

    return out[:n, :no_bins].reshape(*lead_shape, no_bins)


def init_params(key, no_bins, c_in, c_hidden, dtype=jnp.float32):
    """Deterministic synthetic init mirroring the module's __init__:
       he_normal for linear_1/2 weights, zeros for linear_3 weight (final_init_),
       zero biases, LayerNorm gamma=1 / beta=0.
       Weights are stored as [in, out] (i.e. torch W^T) for the kernel."""
    k1, k2 = jax.random.split(key, 2)
    he = lambda k, fan_in, shape: (
        jax.random.normal(k, shape, dtype) * jnp.sqrt(2.0 / fan_in))
    return {
        "ln_g": jnp.ones((1, c_in), dtype),
        "ln_b": jnp.zeros((1, c_in), dtype),
        "w1": he(k1, c_in, (c_in, c_hidden)),
        "b1": jnp.zeros((1, c_hidden), dtype),
        "w2": he(k2, c_hidden, (c_hidden, c_hidden)),
        "b2": jnp.zeros((1, c_hidden), dtype),
        "w3": jnp.zeros((c_hidden, no_bins), dtype),   # final_init_ -> zeros
        "b3": jnp.zeros((1, no_bins), dtype),
    }


def _reference(s, p):
    x = s.astype(jnp.float32)
    mean = jnp.mean(x, axis=-1, keepdims=True)
    var = jnp.mean((x - mean) ** 2, axis=-1, keepdims=True)
    x = (x - mean) / jnp.sqrt(var + LN_EPS)
    x = x * p["ln_g"][0].astype(jnp.float32) + p["ln_b"][0].astype(jnp.float32)
    x = jnp.maximum(x @ p["w1"].astype(jnp.float32) + p["b1"][0].astype(jnp.float32), 0.0)
    x = jnp.maximum(x @ p["w2"].astype(jnp.float32) + p["b2"][0].astype(jnp.float32), 0.0)
    return (x @ p["w3"].astype(jnp.float32) + p["b3"][0].astype(jnp.float32)).astype(s.dtype)


if __name__ == "__main__":
    no_bins, c_in, c_hidden = 16, 32, 32
    batch, seq = 2, 8

    key = jax.random.PRNGKey(0)
    k_s, k_p, k_w3, k_b3 = jax.random.split(key, 4)
    s = jax.random.normal(k_s, (batch, seq, c_in), jnp.float32)
    params = init_params(k_p, no_bins, c_in, c_hidden)
    # Override the (spec-mandated zero) final layer with random values so the
    # numerical check actually exercises the last matmul path.
    params["w3"] = jax.random.normal(k_w3, (c_hidden, no_bins), jnp.float32) * 0.1
    params["b3"] = jax.random.normal(k_b3, (1, no_bins), jnp.float32) * 0.1

    out = per_residue_lddt_ca_predictor(s, params)
    out = jax.block_until_ready(out)

    ref = _reference(s, params)
    assert out.shape == (batch, seq, no_bins), out.shape
    assert jnp.allclose(out, ref, atol=1e-5, rtol=1e-5), "mismatch vs reference"

    print("KERNEL_OK")
</pallas_src>

<mosaic_0001>
module attributes {stable_mosaic.version = 11 : i64} {
  func.func @_plddt_kernel(%arg0: i32, %arg1: memref<8x32xf32, #tpu.memory_space<vmem>>, %arg2: memref<1x32xf32, #tpu.memory_space<vmem>>, %arg3: memref<1x32xf32, #tpu.memory_space<vmem>>, %arg4: memref<32x32xf32, #tpu.memory_space<vmem>>, %arg5: memref<1x32xf32, #tpu.memory_space<vmem>>, %arg6: memref<32x32xf32, #tpu.memory_space<vmem>>, %arg7: memref<1x32xf32, #tpu.memory_space<vmem>>, %arg8: memref<32x128xf32, #tpu.memory_space<vmem>>, %arg9: memref<1x128xf32, #tpu.memory_space<vmem>>, %arg10: memref<8x128xf32, #tpu.memory_space<vmem>>) attributes {dimension_semantics = [#tpu.dimension_semantics<parallel>], iteration_bounds = array<i64: 2>, scalar_prefetch = 0 : i64, scratch_operands = 0 : i64, tpu.core_type = #tpu.core_type<tc>, window_params = [{transform_indices = @transform_0, window_bounds = array<i64: 8, 32>}, {pipeline_mode = #tpu.pipeline_mode<synchronous>, transform_indices = @transform_1, window_bounds = array<i64: 1, 32>}, {pipeline_mode = #tpu.pipeline_mode<synchronous>, transform_indices = @transform_2, window_bounds = array<i64: 1, 32>}, {pipeline_mode = #tpu.pipeline_mode<synchronous>, transform_indices = @transform_3, window_bounds = array<i64: 32, 32>}, {pipeline_mode = #tpu.pipeline_mode<synchronous>, transform_indices = @transform_4, window_bounds = array<i64: 1, 32>}, {pipeline_mode = #tpu.pipeline_mode<synchronous>, transform_indices = @transform_5, window_bounds = array<i64: 32, 32>}, {pipeline_mode = #tpu.pipeline_mode<synchronous>, transform_indices = @transform_6, window_bounds = array<i64: 1, 32>}, {pipeline_mode = #tpu.pipeline_mode<synchronous>, transform_indices = @transform_7, window_bounds = array<i64: 32, 128>}, {pipeline_mode = #tpu.pipeline_mode<synchronous>, transform_indices = @transform_8, window_bounds = array<i64: 1, 128>}, {transform_indices = @transform_9, window_bounds = array<i64: 8, 128>}]} {
    %c0 = arith.constant 0 : index
    %c0_0 = arith.constant 0 : index
    %0 = vector.load %arg1[%c0, %c0_0] : memref<8x32xf32, #tpu.memory_space<vmem>>, vector<8x32xf32>
    %cst = arith.constant dense<0.000000e+00> : vector<8xf32>
    %1 = vector.multi_reduction <add>, %0, %cst [1] : vector<8x32xf32> to vector<8xf32>
    %2 = vector.shape_cast %1 : vector<8xf32> to vector<8x1xf32>
    %cst_1 = arith.constant 3.200000e+01 : f32
    %3 = vector.broadcast %cst_1 : f32 to vector<8x1xf32>
    %4 = arith.divf %2, %3 : vector<8x1xf32>
    %5 = vector.broadcast %4 : vector<8x1xf32> to vector<8x32xf32>
    %6 = arith.subf %0, %5 : vector<8x32xf32>
    %7 = arith.mulf %6, %6 : vector<8x32xf32>
    %cst_2 = arith.constant dense<0.000000e+00> : vector<8xf32>
    %8 = vector.multi_reduction <add>, %7, %cst_2 [1] : vector<8x32xf32> to vector<8xf32>
    %9 = vector.shape_cast %8 : vector<8xf32> to vector<8x1xf32>
    %cst_3 = arith.constant 3.200000e+01 : f32
    %10 = vector.broadcast %cst_3 : f32 to vector<8x1xf32>
    %11 = arith.divf %9, %10 : vector<8x1xf32>
    %cst_4 = arith.constant 9.99999974E-6 : f32
    %12 = vector.broadcast %cst_4 : f32 to vector<8x1xf32>
    %13 = arith.addf %11, %12 : vector<8x1xf32>
    %14 = math.rsqrt %13 : vector<8x1xf32>
    %15 = vector.broadcast %14 : vector<8x1xf32> to vector<8x32xf32>
    %16 = arith.mulf %6, %15 : vector<8x32xf32>
    %c0_5 = arith.constant 0 : index
    %c0_6 = arith.constant 0 : index
    %17 = vector.load %arg2[%c0_5, %c0_6] : memref<1x32xf32, #tpu.memory_space<vmem>>, vector<1x32xf32>
    %18 = vector.broadcast %17 : vector<1x32xf32> to vector<8x32xf32>
    %19 = arith.mulf %16, %18 : vector<8x32xf32>
    %c0_7 = arith.constant 0 : index
    %c0_8 = arith.constant 0 : index
    %20 = vector.load %arg3[%c0_7, %c0_8] : memref<1x32xf32, #tpu.memory_space<vmem>>, vector<1x32xf32>
    %21 = vector.broadcast %20 : vector<1x32xf32> to vector<8x32xf32>
    %22 = arith.addf %19, %21 : vector<8x32xf32>
    %c0_9 = arith.constant 0 : index
    %c0_10 = arith.constant 0 : index
    %23 = vector.load %arg4[%c0_9, %c0_10] : memref<32x32xf32, #tpu.memory_space<vmem>>, vector<32x32xf32>
    %cst_11 = arith.constant dense<0.000000e+00> : vector<8x32xf32>
    %24 = tpu.matmul %22, %23, %cst_11 {dimension_numbers = #tpu.dot_dimension_numbers<[1], [0], [0], [1], [0, 0, 1, 1], [], []>} : vector<8x32xf32>, vector<32x32xf32>, vector<8x32xf32> -> vector<8x32xf32>
    %c0_12 = arith.constant 0 : index
    %c0_13 = arith.constant 0 : index
    %25 = vector.load %arg5[%c0_12, %c0_13] : memref<1x32xf32, #tpu.memory_space<vmem>>, vector<1x32xf32>
    %26 = vector.broadcast %25 : vector<1x32xf32> to vector<8x32xf32>
    %27 = arith.addf %24, %26 : vector<8x32xf32>
    %cst_14 = arith.constant 0.000000e+00 : f32
    %28 = vector.broadcast %cst_14 : f32 to vector<8x32xf32>
    %29 = arith.maximumf %27, %28 : vector<8x32xf32>
    %c0_15 = arith.constant 0 : index
    %c0_16 = arith.constant 0 : index
    %30 = vector.load %arg6[%c0_15, %c0_16] : memref<32x32xf32, #tpu.memory_space<vmem>>, vector<32x32xf32>
    %cst_17 = arith.constant dense<0.000000e+00> : vector<8x32xf32>
    %31 = tpu.matmul %29, %30, %cst_17 {dimension_numbers = #tpu.dot_dimension_numbers<[1], [0], [0], [1], [0, 0, 1, 1], [], []>} : vector<8x32xf32>, vector<32x32xf32>, vector<8x32xf32> -> vector<8x32xf32>
    %c0_18 = arith.constant 0 : index
    %c0_19 = arith.constant 0 : index
    %32 = vector.load %arg7[%c0_18, %c0_19] : memref<1x32xf32, #tpu.memory_space<vmem>>, vector<1x32xf32>
    %33 = vector.broadcast %32 : vector<1x32xf32> to vector<8x32xf32>
    %34 = arith.addf %31, %33 : vector<8x32xf32>
    %cst_20 = arith.constant 0.000000e+00 : f32
    %35 = vector.broadcast %cst_20 : f32 to vector<8x32xf32>
    %36 = arith.maximumf %34, %35 : vector<8x32xf32>
    %c0_21 = arith.constant 0 : index
    %c0_22 = arith.constant 0 : index
    %37 = vector.load %arg8[%c0_21, %c0_22] : memref<32x128xf32, #tpu.memory_space<vmem>>, vector<32x128xf32>
    %cst_23 = arith.constant dense<0.000000e+00> : vector<8x128xf32>
    %38 = tpu.matmul %36, %37, %cst_23 {dimension_numbers = #tpu.dot_dimension_numbers<[1], [0], [0], [1], [0, 0, 1, 1], [], []>} : vector<8x32xf32>, vector<32x128xf32>, vector<8x128xf32> -> vector<8x128xf32>
    %c0_24 = arith.constant 0 : index
    %c0_25 = arith.constant 0 : index
    %39 = vector.load %arg9[%c0_24, %c0_25] : memref<1x128xf32, #tpu.memory_space<vmem>>, vector<1x128xf32>
    %40 = vector.broadcast %39 : vector<1x128xf32> to vector<8x128xf32>
    %41 = arith.addf %38, %40 : vector<8x128xf32>
    %c0_26 = arith.constant 0 : index
    %c0_27 = arith.constant 0 : index
    %42 = vector.load %arg10[%c0_26, %c0_27] : memref<8x128xf32, #tpu.memory_space<vmem>>, vector<8x128xf32>
    tpu.vector_store %arg10[%c0_26, %c0_27], %41 {strides = array<i32>} : memref<8x128xf32, #tpu.memory_space<vmem>>, vector<8x128xf32>,
    return
  }
  func.func @transform_0(%arg0: i32) -> (i32, i32) {
    %c0_i32 = arith.constant 0 : i32
    %c0_i32_0 = arith.constant 0 : i32
    return %arg0, %c0_i32 : i32, i32
  }
  func.func @transform_1(%arg0: i32) -> (i32, i32) {
    %c0_i32 = arith.constant 0 : i32
    %c0_i32_0 = arith.constant 0 : i32
    %c0_i32_1 = arith.constant 0 : i32
    return %c0_i32, %c0_i32_0 : i32, i32
  }
  func.func @transform_2(%arg0: i32) -> (i32, i32) {
    %c0_i32 = arith.constant 0 : i32
    %c0_i32_0 = arith.constant 0 : i32
    %c0_i32_1 = arith.constant 0 : i32
    return %c0_i32, %c0_i32_0 : i32, i32
  }
  func.func @transform_3(%arg0: i32) -> (i32, i32) {
    %c0_i32 = arith.constant 0 : i32
    %c0_i32_0 = arith.constant 0 : i32
    %c0_i32_1 = arith.constant 0 : i32
    return %c0_i32, %c0_i32_0 : i32, i32
  }
  func.func @transform_4(%arg0: i32) -> (i32, i32) {
    %c0_i32 = arith.constant 0 : i32
    %c0_i32_0 = arith.constant 0 : i32
    %c0_i32_1 = arith.constant 0 : i32
    return %c0_i32, %c0_i32_0 : i32, i32
  }
  func.func @transform_5(%arg0: i32) -> (i32, i32) {
    %c0_i32 = arith.constant 0 : i32
    %c0_i32_0 = arith.constant 0 : i32
    %c0_i32_1 = arith.constant 0 : i32
    return %c0_i32, %c0_i32_0 : i32, i32
  }
  func.func @transform_6(%arg0: i32) -> (i32, i32) {
    %c0_i32 = arith.constant 0 : i32
    %c0_i32_0 = arith.constant 0 : i32
    %c0_i32_1 = arith.constant 0 : i32
    return %c0_i32, %c0_i32_0 : i32, i32
  }
  func.func @transform_7(%arg0: i32) -> (i32, i32) {
    %c0_i32 = arith.constant 0 : i32
    %c0_i32_0 = arith.constant 0 : i32
    %c0_i32_1 = arith.constant 0 : i32
    return %c0_i32, %c0_i32_0 : i32, i32
  }
  func.func @transform_8(%arg0: i32) -> (i32, i32) {
    %c0_i32 = arith.constant 0 : i32
    %c0_i32_0 = arith.constant 0 : i32
    %c0_i32_1 = arith.constant 0 : i32
    return %c0_i32, %c0_i32_0 : i32, i32
  }
  func.func @transform_9(%arg0: i32) -> (i32, i32) {
    %c0_i32 = arith.constant 0 : i32
    %c0_i32_0 = arith.constant 0 : i32
    return %arg0, %c0_i32 : i32, i32
  }
}

</mosaic_0001>

<llo_original>
// kernel: tpu_custom_call.1
$region0: #{tpu_custom_call.1}
  #allocation0 [shape = 'u32[]', space=smem, size = 0x4, offset = 0x4, fixed_abs, tag = 'smem constant byte address 0x4 - core index']
  #allocation1 [shape = 'u32[144,128]{1,0:T(1,128)}', space=vmem, size = 0x12000, scoped, tag = 'internal scratch']
  %s0 = inlined_call_operand.hbm [shape: f32[16,32], index: 0, kind: input, shape index: {}]
  %s1 = inlined_call_operand.vmem [shape: f32[1,32], index: 1, kind: input, shape index: {}]
  %s2 = inlined_call_operand.vmem [shape: f32[1,32], index: 2, kind: input, shape index: {}]
  %s3 = inlined_call_operand.hbm [shape: f32[32,32], index: 3, kind: input, shape index: {}]
  %s4 = inlined_call_operand.vmem [shape: f32[1,32], index: 4, kind: input, shape index: {}]
  %s5 = inlined_call_operand.hbm [shape: f32[32,32], index: 5, kind: input, shape index: {}]
  %s6 = inlined_call_operand.vmem [shape: f32[1,32], index: 6, kind: input, shape index: {}]
  %s7 = inlined_call_operand.hbm [shape: f32[32,128], index: 7, kind: input, shape index: {}]
  %s8 = inlined_call_operand.vmem [shape: f32[1,128], index: 8, kind: input, shape index: {}]
  %s9 = inlined_call_operand.hbm [shape: f32[16,128], index: 9, kind: output, shape index: {}]
  %s10 = sld [smem:[#allocation0]]
  $region85: #{tpu_custom_call.1} parent=0
    _
  %s12 = ssub.s32 1, %s10
  %s13 = scalar_select 0, %s12, %s10
  $region1: #{tpu_custom_call.1} parent=0
    #allocation2 [shape = 'u8[8192]{0}', space=vmem, size = 0x2000, scoped, tag = 'input window, operand 0']
    #allocation3 [shape = 's32[2]{0}', space=sflag, size = 0x8, scoped, tag = 'scoped memory for tpu_custom_call.1']
    #allocation4 [shape = 's32[2]{0}', space=sflag, size = 0x8, scoped, tag = 'scoped memory for tpu_custom_call.1']
    #allocation5 [shape = 'u8[16384]{0}', space=vmem, size = 0x4000, scoped, tag = 'input window, operand 3, single buffered']
    #allocation6 [shape = 's32[1]{0}', space=sflag, size = 0x4, scoped, tag = 'scoped memory for tpu_custom_call.1']
    #allocation7 [shape = 'u8[16384]{0}', space=vmem, size = 0x4000, scoped, tag = 'input window, operand 5, single buffered']
    #allocation8 [shape = 'u8[16384]{0}', space=vmem, size = 0x4000, scoped, tag = 'input window, operand 7, single buffered']
    #allocation9 [shape = 's32[1]{0}', space=sflag, size = 0x4, scoped, tag = 'scoped memory for tpu_custom_call.1']
    #allocation10 [shape = 'u8[8192]{0}', space=vmem, size = 0x2000, scoped, tag = 'output window, operand 0']
    %14 = vsyncpa [#allocation3], 0
    %s15 = scalar_lea.sflag [#allocation3], 1
    %16 = vsyncpa %s15, 0
    %17 = vsyncpa [#allocation6], 0
    %18 = vsyncpa [#allocation9], 0
    %19 = vsyncpa [#allocation4], 0
    %s20 = scalar_lea.sflag [#allocation4], 1
    %21 = vsyncpa %s20, 0
    loop: start=0, step=1, limit=4
    $region2: #{tpu_custom_call.1} parent=1 // loop_pre_header
      _
    $region3: #{tpu_custom_call.1} parent=1 // loop_header
      %s23 = sphi 0, %s27
      %p24 = scmp.ge.s32.totalorder %s23, 4
      %s33 = sphi 0, %s35
      %s36 = sphi 0, %s33
      %s37 = sphi 0, %s36
      %s53 = sphi 0, %s37
      %s57 = sphi 0, %s57
      %s59 = sphi 0, %s57
      %s60 = sphi 0, %s59
      %s74 = sphi 0, %s60
      %s78 = sphi 0, %s78
      %s80 = sphi 0, %s78
      %s81 = sphi 0, %s80
      %s95 = sphi 0, %s81
      %s99 = sphi 0, %s99
      %s101 = sphi 0, %s99
      %s102 = sphi 0, %s101
      %s116 = sphi 0, %s102
      %s120 = sphi 0, %s120
      %s122 = sphi 0, %s120
      %s123 = sphi 0, %s122
      %s137 = sphi 0, %s123
      %s141 = sphi 0, %s141
      %s143 = sphi 0, %s141
      %s144 = sphi 0, %s143
      %s158 = sphi 0, %s144
      %s162 = sphi 0, %s162
      %s164 = sphi 0, %s162
      %s165 = sphi 0, %s164
      %s179 = sphi 0, %s165
      %s183 = sphi 0, %s183
      %s185 = sphi 0, %s183
      %s186 = sphi 0, %s185
      %s200 = sphi 0, %s186
      %s204 = sphi 0, %s204
      %s206 = sphi 0, %s204
      %s207 = sphi 0, %s206
      %s221 = sphi 0, %s207
      %s227 = sphi 0, %s229
      %s230 = sphi 0, %s227
      %s231 = sphi 0, %s230
      %s247 = sphi 0, %s231
    $region4: #{tpu_custom_call.1} parent=1 // loop_header_branch
      %26 = sbr.rel (%p24) target = $region8
    $region5: #{tpu_custom_call.1} parent=1 // loop_body
      %s28 = ssub.s32 %s23, 1
      %s29 = ssub.s32 %s23, 2
      %s30 = sadd.s32 %s23, 1
      %s31 = ssub.s32 %s23, %s30
      %p32 = scmp.eq.s32.totalorder %s31, 0
      %s34 = sadd.s32 %s33, 1
      %s35 = scalar_select %p32, %s33, %s34
      %p38 = pneg %p32
      %p39 = scmp.eq.s32.totalorder %s23, 1
      %p40 = por %p38, %p39
      %p41 = scmp.ne.s32.totalorder %s33, %s36
      %p42 = scmp.eq.s32.totalorder %s23, 0
      %p43 = por %p41, %p42
      %p44 = scmp.ne.s32.totalorder %s33, %s36
      %p45 = scmp.eq.s32.totalorder %s28, 1
      %p46 = por %p44, %p45
      %p47 = scmp.ne.s32.totalorder %s36, %s37
      %p48 = scmp.eq.s32.totalorder %s28, 0
      %p49 = por %p47, %p48
      %p50 = scmp.ne.s32.totalorder %s36, %s37
      %p51 = scmp.eq.s32.totalorder %s29, 1
      %p52 = por %p50, %p51
      %p54 = scmp.ne.s32.totalorder %s37, %s53
      %p55 = scmp.eq.s32.totalorder %s29, 0
      %p56 = por %p54, %p55
      %s58 = sadd.s32 %s57, 1
      %p61 = scmp.eq.s32.totalorder %s23, 1
      %p62 = scmp.ne.s32.totalorder %s57, %s59
      %p63 = scmp.eq.s32.totalorder %s23, 0
      %p64 = por %p62, %p63
      %p65 = scmp.ne.s32.totalorder %s57, %s59
      %p66 = scmp.eq.s32.totalorder %s28, 1
      %p67 = por %p65, %p66
      %p68 = scmp.ne.s32.totalorder %s59, %s60
      %p69 = scmp.eq.s32.totalorder %s28, 0
      %p70 = por %p68, %p69
      %p71 = scmp.ne.s32.totalorder %s59, %s60
      %p72 = scmp.eq.s32.totalorder %s29, 1
      %p73 = por %p71, %p72
      %p75 = scmp.ne.s32.totalorder %s60, %s74
      %p76 = scmp.eq.s32.totalorder %s29, 0
      %p77 = por %p75, %p76
      %s79 = sadd.s32 %s78, 1
      %p82 = scmp.eq.s32.totalorder %s23, 1
      %p83 = scmp.ne.s32.totalorder %s78, %s80
      %p84 = scmp.eq.s32.totalorder %s23, 0
      %p85 = por %p83, %p84
      %p86 = scmp.ne.s32.totalorder %s78, %s80
      %p87 = scmp.eq.s32.totalorder %s28, 1
      %p88 = por %p86, %p87
      %p89 = scmp.ne.s32.totalorder %s80, %s81
      %p90 = scmp.eq.s32.totalorder %s28, 0
      %p91 = por %p89, %p90
      %p92 = scmp.ne.s32.totalorder %s80, %s81
      %p93 = scmp.eq.s32.totalorder %s29, 1
      %p94 = por %p92, %p93
      %p96 = scmp.ne.s32.totalorder %s81, %s95
      %p97 = scmp.eq.s32.totalorder %s29, 0
      %p98 = por %p96, %p97
      %s100 = sadd.s32 %s99, 1
      %p103 = scmp.eq.s32.totalorder %s23, 1
      %p104 = scmp.ne.s32.totalorder %s99, %s101
      %p105 = scmp.eq.s32.totalorder %s23, 0
      %p106 = por %p104, %p105
      %p107 = scmp.ne.s32.totalorder %s99, %s101
      %p108 = scmp.eq.s32.totalorder %s28, 1
      %p109 = por %p107, %p108
      %p110 = scmp.ne.s32.totalorder %s101, %s102
      %p111 = scmp.eq.s32.totalorder %s28, 0
      %p112 = por %p110, %p111
      %p113 = scmp.ne.s32.totalorder %s101, %s102
      %p114 = scmp.eq.s32.totalorder %s29, 1
      %p115 = por %p113, %p114
      %p117 = scmp.ne.s32.totalorder %s102, %s116
      %p118 = scmp.eq.s32.totalorder %s29, 0
      %p119 = por %p117, %p118
      %s121 = sadd.s32 %s120, 1
      %p124 = scmp.eq.s32.totalorder %s23, 1
      %p125 = scmp.ne.s32.totalorder %s120, %s122
      %p126 = scmp.eq.s32.totalorder %s23, 0
      %p127 = por %p125, %p126
      %p128 = scmp.ne.s32.totalorder %s120, %s122
      %p129 = scmp.eq.s32.totalorder %s28, 1
      %p130 = por %p128, %p129
      %p131 = scmp.ne.s32.totalorder %s122, %s123
      %p132 = scmp.eq.s32.totalorder %s28, 0
      %p133 = por %p131, %p132
      %p134 = scmp.ne.s32.totalorder %s122, %s123
      %p135 = scmp.eq.s32.totalorder %s29, 1
      %p136 = por %p134, %p135
      %p138 = scmp.ne.s32.totalorder %s123, %s137
      %p139 = scmp.eq.s32.totalorder %s29, 0
      %p140 = por %p138, %p139
      %s142 = sadd.s32 %s141, 1
      %p145 = scmp.eq.s32.totalorder %s23, 1
      %p146 = scmp.ne.s32.totalorder %s141, %s143
      %p147 = scmp.eq.s32.totalorder %s23, 0
      %p148 = por %p146, %p147
      %p149 = scmp.ne.s32.totalorder %s141, %s143
      %p150 = scmp.eq.s32.totalorder %s28, 1
      %p151 = por %p149, %p150
      %p152 = scmp.ne.s32.totalorder %s143, %s144
      %p153 = scmp.eq.s32.totalorder %s28, 0
      %p154 = por %p152, %p153
      %p155 = scmp.ne.s32.totalorder %s143, %s144
      %p156 = scmp.eq.s32.totalorder %s29, 1
      %p157 = por %p155, %p156
      %p159 = scmp.ne.s32.totalorder %s144, %s158
      %p160 = scmp.eq.s32.totalorder %s29, 0
      %p161 = por %p159, %p160
      %s163 = sadd.s32 %s162, 1
      %p166 = scmp.eq.s32.totalorder %s23, 1
      %p167 = scmp.ne.s32.totalorder %s162, %s164
      %p168 = scmp.eq.s32.totalorder %s23, 0
      %p169 = por %p167, %p168
      %p170 = scmp.ne.s32.totalorder %s162, %s164
      %p171 = scmp.eq.s32.totalorder %s28, 1
      %p172 = por %p170, %p171
      %p173 = scmp.ne.s32.totalorder %s164, %s165
      %p174 = scmp.eq.s32.totalorder %s28, 0
      %p175 = por %p173, %p174
      %p176 = scmp.ne.s32.totalorder %s164, %s165
      %p177 = scmp.eq.s32.totalorder %s29, 1
      %p178 = por %p176, %p177
      %p180 = scmp.ne.s32.totalorder %s165, %s179
      %p181 = scmp.eq.s32.totalorder %s29, 0
      %p182 = por %p180, %p181
      %s184 = sadd.s32 %s183, 1
      %p187 = scmp.eq.s32.totalorder %s23, 1
      %p188 = scmp.ne.s32.totalorder %s183, %s185
      %p189 = scmp.eq.s32.totalorder %s23, 0
      %p190 = por %p188, %p189
      %p191 = scmp.ne.s32.totalorder %s183, %s185
      %p192 = scmp.eq.s32.totalorder %s28, 1
      %p193 = por %p191, %p192
      %p194 = scmp.ne.s32.totalorder %s185, %s186
      %p195 = scmp.eq.s32.totalorder %s28, 0
      %p196 = por %p194, %p195
      %p197 = scmp.ne.s32.totalorder %s185, %s186
      %p198 = scmp.eq.s32.totalorder %s29, 1
      %p199 = por %p197, %p198
      %p201 = scmp.ne.s32.totalorder %s186, %s200
      %p202 = scmp.eq.s32.totalorder %s29, 0
      %p203 = por %p201, %p202
      %s205 = sadd.s32 %s204, 1
      %p208 = scmp.eq.s32.totalorder %s23, 1
      %p209 = scmp.ne.s32.totalorder %s204, %s206
      %p210 = scmp.eq.s32.totalorder %s23, 0
      %p211 = por %p209, %p210
      %p212 = scmp.ne.s32.totalorder %s204, %s206
      %p213 = scmp.eq.s32.totalorder %s28, 1
      %p214 = por %p212, %p213
      %p215 = scmp.ne.s32.totalorder %s206, %s207
      %p216 = scmp.eq.s32.totalorder %s28, 0
      %p217 = por %p215, %p216
      %p218 = scmp.ne.s32.totalorder %s206, %s207
      %p219 = scmp.eq.s32.totalorder %s29, 1
      %p220 = por %p218, %p219
      %p222 = scmp.ne.s32.totalorder %s207, %s221
      %p223 = scmp.eq.s32.totalorder %s29, 0
      %p224 = por %p222, %p223
      %s225 = ssub.s32 %s23, %s30
      %p226 = scmp.eq.s32.totalorder %s225, 0
      %s228 = sadd.s32 %s227, 1
      %s229 = scalar_select %p226, %s227, %s228
      %p232 = pneg %p226
      %p233 = scmp.eq.s32.totalorder %s23, 1
      %p234 = por %p232, %p233
      %p235 = scmp.ne.s32.totalorder %s227, %s230
      %p236 = scmp.eq.s32.totalorder %s23, 0
      %p237 = por %p235, %p236
      %p238 = scmp.ne.s32.totalorder %s227, %s230
      %p239 = scmp.eq.s32.totalorder %s28, 1
      %p240 = por %p238, %p239
      %p241 = scmp.ne.s32.totalorder %s230, %s231
      %p242 = scmp.eq.s32.totalorder %s28, 0
      %p243 = por %p241, %p242
      %p244 = scmp.ne.s32.totalorder %s230, %s231
      %p245 = scmp.eq.s32.totalorder %s29, 1
      %p246 = por %p244, %p245
      %p248 = scmp.ne.s32.totalorder %s231, %s247
      %p249 = scmp.eq.s32.totalorder %s29, 0
      %p250 = por %p248, %p249
      %p251 = scmp.le.s32.totalorder 1, %s23
      %p252 = scmp.lt.s32.totalorder %s23, 3
      %p253 = pnand %p251, %p252
      %p254 = pneg %p253
      // Predicated region
      $region9: #{tpu_custom_call.1} parent=5 // pred_check
        _
      $region10: #{tpu_custom_call.1} parent=5 // pred_check_branch
        %256 = sbr.rel (%p253) target = $region12
      $region11: #{tpu_custom_call.1} parent=5 // pred_region
        %s257 = ssub.s32 %s23, 1
        // Predicated region
        $region13: #{tpu_custom_call.1} parent=11 // pred_check
          %p258 = pneg %p70
        $region14: #{tpu_custom_call.1} parent=11 // pred_check_branch
          %260 = sbr.rel (%p258) target = $region16
        $region15: #{tpu_custom_call.1} parent=11 // pred_region
          _
        $region16: #{tpu_custom_call.1} parent=11 // pred_fallthru
          _
        // Predicated region
        $region17: #{tpu_custom_call.1} parent=11 // pred_check
          %p261 = pneg %p91
        $region18: #{tpu_custom_call.1} parent=11 // pred_check_branch
          %263 = sbr.rel (%p261) target = $region20
        $region19: #{tpu_custom_call.1} parent=11 // pred_region
          _
        $region20: #{tpu_custom_call.1} parent=11 // pred_fallthru
          _
        // Predicated region
        $region21: #{tpu_custom_call.1} parent=11 // pred_check
          %p264 = pneg %p112
        $region22: #{tpu_custom_call.1} parent=11 // pred_check_branch
          %266 = sbr.rel (%p264) target = $region24
        $region23: #{tpu_custom_call.1} parent=11 // pred_region
          %s268 = ssub.s32 512, 512
          %269 = vsyncadd [#allocation6], %s268
          %s270 = sshll.u32 [#allocation5], 4
          %s271 = int_to_ptr.vmem [resolvable:$true] %s270
          %276 = dma.hbm_to_vmem [thread:$0]  %s3, 512, %s271, [#allocation6], 128, 128, 8
        $region24: #{tpu_custom_call.1} parent=11 // pred_fallthru
          _
        // Predicated region
        $region25: #{tpu_custom_call.1} parent=11 // pred_check
          %p277 = pneg %p133
        $region26: #{tpu_custom_call.1} parent=11 // pred_check_branch
          %279 = sbr.rel (%p277) target = $region28
        $region27: #{tpu_custom_call.1} parent=11 // pred_region
          _
        $region28: #{tpu_custom_call.1} parent=11 // pred_fallthru
          _
        // Predicated region
        $region29: #{tpu_custom_call.1} parent=11 // pred_check
          %p280 = pneg %p154
        $region30: #{tpu_custom_call.1} parent=11 // pred_check_branch
          %282 = sbr.rel (%p280) target = $region32
        $region31: #{tpu_custom_call.1} parent=11 // pred_region
          %s284 = ssub.s32 512, 512
          %285 = vsyncadd [#allocation6], %s284
          %s286 = sshll.u32 [#allocation7], 4
          %s287 = int_to_ptr.vmem [resolvable:$true] %s286
          %292 = dma.hbm_to_vmem [thread:$0]  %s5, 512, %s287, [#allocation6], 128, 128, 8
        $region32: #{tpu_custom_call.1} parent=11 // pred_fallthru
          _
        // Predicated region
        $region33: #{tpu_custom_call.1} parent=11 // pred_check
          %p293 = pneg %p175
        $region34: #{tpu_custom_call.1} parent=11 // pred_check_branch
          %295 = sbr.rel (%p293) target = $region36
        $region35: #{tpu_custom_call.1} parent=11 // pred_region
          _
        $region36: #{tpu_custom_call.1} parent=11 // pred_fallthru
          _
        // Predicated region
        $region37: #{tpu_custom_call.1} parent=11 // pred_check
          %p296 = pneg %p196
        $region38: #{tpu_custom_call.1} parent=11 // pred_check_branch
          %298 = sbr.rel (%p296) target = $region40
        $region39: #{tpu_custom_call.1} parent=11 // pred_region
          %s300 = ssub.s32 512, 512
          %301 = vsyncadd [#allocation9], %s300
          %s302 = sshll.u32 [#allocation8], 4
          %s303 = int_to_ptr.vmem [resolvable:$true] %s302
          %308 = dma.hbm_to_vmem [thread:$0]  %s7, 512, %s303, [#allocation9], 128, 128, 8
        $region40: #{tpu_custom_call.1} parent=11 // pred_fallthru
          _
        // Predicated region
        $region41: #{tpu_custom_call.1} parent=11 // pred_check
          %p309 = pneg %p217
        $region42: #{tpu_custom_call.1} parent=11 // pred_check_branch
          %311 = sbr.rel (%p309) target = $region44
        $region43: #{tpu_custom_call.1} parent=11 // pred_region
          _
        $region44: #{tpu_custom_call.1} parent=11 // pred_fallthru
          _
      $region12: #{tpu_custom_call.1} parent=5 // pred_fallthru
        _
      %p312 = scmp.lt.s32.totalorder %s23, 2
      // Predicated region
      $region45: #{tpu_custom_call.1} parent=5 // pred_check
        %p313 = pneg %p312
      $region46: #{tpu_custom_call.1} parent=5 // pred_check_branch
        %315 = sbr.rel (%p313) target = $region48
      $region47: #{tpu_custom_call.1} parent=5 // pred_region
        // Predicated region
        $region49: #{tpu_custom_call.1} parent=47 // pred_check
          %p316 = pneg %p43
        $region50: #{tpu_custom_call.1} parent=47 // pred_check_branch
          %318 = sbr.rel (%p316) target = $region52
        $region51: #{tpu_custom_call.1} parent=47 // pred_region
          %s319 = sand.u32 %s33, 1
          %s320 = scalar_lea.sflag [#allocation3], %s319
          %s321 = sand.u32 %s33, 1
          %s322 = smul.addr %s321, 8
          %s323 = scalar_lea.vmem [#allocation2], %s322
          %s325 = ssub.s32 128, 128
          %326 = vsyncadd %s320, %s325
          %s327 = smul.addr %s23, 128
          %s328 = scalar_lea.hbm %s0, %s327
          %s330 = sshll.u32 %s323, 4
          %s331 = int_to_ptr.vmem [resolvable:$true] %s330
          %333 = dma.hbm_to_vmem [thread:$0]  %s328, 128, %s331, %s320
        $region52: #{tpu_custom_call.1} parent=47 // pred_fallthru
          _
      $region48: #{tpu_custom_call.1} parent=5 // pred_fallthru
        _
      %p334 = scmp.le.s32.totalorder 1, %s23
      %p335 = scmp.lt.s32.totalorder %s23, 3
      %p336 = pnand %p334, %p335
      %p337 = pneg %p336
      // Predicated region
      $region53: #{tpu_custom_call.1} parent=5 // pred_check
        _
      $region54: #{tpu_custom_call.1} parent=5 // pred_check_branch
        %339 = sbr.rel (%p336) target = $region56
      $region55: #{tpu_custom_call.1} parent=5 // pred_region
        %s340 = ssub.s32 %s23, 1
        %s341 = sand.u32 %s36, 1
        %s342 = scalar_lea.sflag [#allocation3], %s341
        %s343 = sand.u32 %s36, 1
        %s344 = smul.addr %s343, 8
        %s345 = scalar_lea.vmem [#allocation2], %s344
        // Predicated region
        $region57: #{tpu_custom_call.1} parent=55 // pred_check
          %p346 = pneg %p49
        $region58: #{tpu_custom_call.1} parent=55 // pred_check_branch
          %348 = sbr.rel (%p346) target = $region60
        $region59: #{tpu_custom_call.1} parent=55 // pred_region
          %349 = dma.done %s342, 128
        $region60: #{tpu_custom_call.1} parent=55 // pred_fallthru
          _
        // Predicated region
        $region61: #{tpu_custom_call.1} parent=55 // pred_check
          %p350 = pneg %p112
        $region62: #{tpu_custom_call.1} parent=55 // pred_check_branch
          %352 = sbr.rel (%p350) target = $region64
        $region63: #{tpu_custom_call.1} parent=55 // pred_region
          %353 = dma.done [#allocation6], 512
        $region64: #{tpu_custom_call.1} parent=55 // pred_fallthru
          _
        // Predicated region
        $region65: #{tpu_custom_call.1} parent=55 // pred_check
          %p354 = pneg %p154
        $region66: #{tpu_custom_call.1} parent=55 // pred_check_branch
          %356 = sbr.rel (%p354) target = $region68
        $region67: #{tpu_custom_call.1} parent=55 // pred_region
          %357 = dma.done [#allocation6], 512
        $region68: #{tpu_custom_call.1} parent=55 // pred_fallthru
          _
        // Predicated region
        $region69: #{tpu_custom_call.1} parent=55 // pred_check
          %p358 = pneg %p196
        $region70: #{tpu_custom_call.1} parent=55 // pred_check_branch
          %360 = sbr.rel (%p358) target = $region72
        $region71: #{tpu_custom_call.1} parent=55 // pred_region
          %361 = dma.done [#allocation9], 512
        $region72: #{tpu_custom_call.1} parent=55 // pred_fallthru
          _
        %s362 = sand.u32 %s36, 1
        %s363 = scalar_lea.sflag [#allocation3], %s362
        %s364 = sand.u32 %s36, 1
        %s365 = smul.addr %s364, 8
        %s366 = scalar_lea.vmem [#allocation2], %s365
        %p367 = pneg %p49
        %p368 = pneg %p46
        %p369 = pneg %p70
        %p370 = pneg %p67
        %p371 = pneg %p91
        %p372 = pneg %p88
        %p373 = pneg %p112
        %p374 = pneg %p109
        %p375 = pneg %p133
        %p376 = pneg %p130
        %p377 = pneg %p154
        %p378 = pneg %p151
        %p379 = pneg %p175
        %p380 = pneg %p172
        %p381 = pneg %p196
        %p382 = pneg %p193
        %p383 = pneg %p217
        %p384 = pneg %p214
        %p385 = pneg %p243
        %p386 = pneg %p240
        %s387 = sand.u32 %s230, 1
        %s388 = scalar_lea.sflag [#allocation4], %s387
        %s389 = sand.u32 %s230, 1
        %s390 = smul.addr %s389, 8
        %s391 = scalar_lea.vmem [#allocation10], %s390
        %v392 = vld [vmem:[%s345] sm:$0xff]
        %vm393 = vcmask 261120
        %v394 = vsel %vm393, %v392, 0.0
        %395 = vadd.xlane.f32.xlu0 %v394
        %v396 = vpop.xlane.xlu0 %395
        %v397 = vrcp.pop 32.0
        %v398 = vmul.f32 %v396, %v397
        %v399 = vsub.f32 %v392, %v398
        %v400 = vmul.f32 %v399, %v399
        %v401 = vsel %vm393, %v400, 0.0
        %402 = vadd.xlane.f32.xlu0 %v401
        %v403 = vpop.xlane.xlu0 %402
        %v404 = vmul.f32 %v403, %v397
        %v405 = vadd.f32 %v404, 1e-05
        %v406 = vrsqrt.pop %v405
        %v407 = vmul.f32 %v399, %v406
        %v408 = vld [vmem:[%s1] sm:$0x1]
        %v410 = vlaneseq
        %v411 = vshrl.u32 %v410, 7
        %v412 = vsub.s32 0, %v411
        %v413 = vrot.slane %v408, %v412
        %v415 = vmul.f32 %v407, %v413
        %v416 = vld [vmem:[%s2] sm:$0x1]
        %v418 = vlaneseq
        %v419 = vshrl.u32 %v418, 7
        %v420 = vsub.s32 0, %v419
        %v421 = vrot.slane %v416, %v420
        %v423 = vadd.f32 %v415, %v421
        %v424 = vld [vmem:[#allocation5] sm:$0xff]
        %v425 = vld [vmem:[#allocation5 + $0x8] sm:$0xff]
        %v426 = vld [vmem:[#allocation5 + $0x10] sm:$0xff]
        %v427 = vld [vmem:[#allocation5 + $0x18] sm:$0xff]
        %v428 = vld [vmem:[%s4] sm:$0x1]
        %v430 = vlaneseq
        %v431 = vshrl.u32 %v430, 7
        %v432 = vsub.s32 0, %v431
        %v433 = vrot.slane %v428, %v432
        %v436 = vsel %vm393, %v423, 0
        %438 = vmatprep.subr.mxu0 0.0
        %439 = vmatpush1.msra.mxu0 0.0
        %440 = vmatprep.subr.mxu0 0.0
        %441 = vmatpush1.msra.mxu0 0.0
        %442 = vmatprep.subr.mxu0 0.0
        %443 = vmatpush1.msra.mxu0 0.0
        %444 = vmatprep.subr.mxu0 0.0
        %445 = vmatpush1.msra.mxu0 0.0
        %446 = vmatprep.subr.mxu0 0.0
        %447 = vmatpush1.msra.mxu0 0.0
        %448 = vmatprep.subr.mxu0 0.0
        %449 = vmatpush1.msra.mxu0 0.0
        %450 = vmatprep.subr.mxu0 0.0
        %451 = vmatpush1.msra.mxu0 0.0
        %452 = vmatprep.subr.mxu0 0.0
        %453 = vmatpush1.msra.mxu0 0.0
        %454 = vmatprep.subr.mxu0 0.0
        %455 = vmatpush1.msra.mxu0 0.0
        %456 = vmatprep.subr.mxu0 0.0
        %457 = vmatpush1.msra.mxu0 0.0
        %458 = vmatprep.subr.mxu0 0.0
        %459 = vmatpush1.msra.mxu0 0.0
        %460 = vmatprep.subr.mxu0 0.0
        %461 = vmatpush1.msra.mxu0 0.0
        %462 = vmatprep.subr.mxu0 0.0
        %463 = vmatpush1.msra.mxu0 %v427
        %464 = vmatprep.subr.mxu0 0.0
        %465 = vmatpush1.msra.mxu0 %v426
        %466 = vmatprep.subr.mxu0 0.0
        %467 = vmatpush1.msra.mxu0 %v425
        %468 = vmatprep.subr.mxu0 0.0
        %469 = vmatpush1.msra.mxu0 %v424
        %470 = vmatprep.subr.mxu0 0.0
        %471 = vmatpush2.msra.mxu0 0.0
        %472 = vmatprep.subr.mxu0 0.0
        %473 = vmatpush2.msra.mxu0 0.0
        %474 = vmatprep.subr.mxu0 0.0
        %475 = vmatpush2.msra.mxu0 0.0
        %476 = vmatprep.subr.mxu0 0.0
        %477 = vmatpush2.msra.mxu0 0.0
        %478 = vmatprep.subr.mxu0 0.0
        %479 = vmatpush2.msra.mxu0 0.0
        %480 = vmatprep.subr.mxu0 0.0
        %481 = vmatpush2.msra.mxu0 0.0
        %482 = vmatprep.subr.mxu0 0.0
        %483 = vmatpush2.msra.mxu0 0.0
        %484 = vmatprep.subr.mxu0 0.0
        %485 = vmatpush2.msra.mxu0 0.0
        %486 = vmatprep.subr.mxu0 0.0
        %487 = vmatpush2.msra.mxu0 0.0
        %488 = vmatprep.subr.mxu0 0.0
        %489 = vmatpush2.msra.mxu0 0.0
        %490 = vmatprep.subr.mxu0 0.0
        %491 = vmatpush2.msra.mxu0 0.0
        %492 = vmatprep.subr.mxu0 0.0
        %493 = vmatpush2.msra.mxu0 0.0
        %494 = vmatprep.subr.mxu0 0.0
        %495 = vmatpush2.msra.mxu0 0.0
        %496 = vmatprep.subr.mxu0 0.0
        %497 = vmatpush2.msra.mxu0 0.0
        %498 = vmatprep.subr.mxu0 0.0
        %499 = vmatpush2.msra.mxu0 0.0
        %500 = vmatprep.subr.mxu0 0.0
        %501 = vmatpush2.msra.mxu0 0.0
        %502 = vmatprep.mubr.f32.mxu0 0.0
        %503 = vmatmul.mubr.f32.gmra.mxu0 %v436
        %v504 = vpop.f32.mrf.mxu0
        %v505 = vadd.f32 %v433, %v504
        %v506 = vpop.f32.mrf.mxu0
        %507 = vdwg.mxu0
        %v508 = vmax.f32 %v505, 0.0
        %v509 = vld [vmem:[#allocation7] sm:$0xff]
        %v510 = vld [vmem:[#allocation7 + $0x8] sm:$0xff]
        %v511 = vld [vmem:[#allocation7 + $0x10] sm:$0xff]
        %v512 = vld [vmem:[#allocation7 + $0x18] sm:$0xff]
        %v513 = vld [vmem:[%s6] sm:$0x1]
        %v515 = vlaneseq
        %v516 = vshrl.u32 %v515, 7
        %v517 = vsub.s32 0, %v516
        %v518 = vrot.slane %v513, %v517
        %v521 = vsel %vm393, %v508, 0
        %523 = vmatprep.subr.mxu0 0.0
        %524 = vmatpush1.msra.mxu0 0.0
        %525 = vmatprep.subr.mxu0 0.0
        %526 = vmatpush1.msra.mxu0 0.0
        %527 = vmatprep.subr.mxu0 0.0
        %528 = vmatpush1.msra.mxu0 0.0
        %529 = vmatprep.subr.mxu0 0.0
        %530 = vmatpush1.msra.mxu0 0.0
        %531 = vmatprep.subr.mxu0 0.0
        %532 = vmatpush1.msra.mxu0 0.0
        %533 = vmatprep.subr.mxu0 0.0
        %534 = vmatpush1.msra.mxu0 0.0
        %535 = vmatprep.subr.mxu0 0.0
        %536 = vmatpush1.msra.mxu0 0.0
        %537 = vmatprep.subr.mxu0 0.0
        %538 = vmatpush1.msra.mxu0 0.0
        %539 = vmatprep.subr.mxu0 0.0
        %540 = vmatpush1.msra.mxu0 0.0
        %541 = vmatprep.subr.mxu0 0.0
        %542 = vmatpush1.msra.mxu0 0.0
        %543 = vmatprep.subr.mxu0 0.0
        %544 = vmatpush1.msra.mxu0 0.0
        %545 = vmatprep.subr.mxu0 0.0
        %546 = vmatpush1.msra.mxu0 0.0
        %547 = vmatprep.subr.mxu0 0.0
        %548 = vmatpush1.msra.mxu0 %v512
        %549 = vmatprep.subr.mxu0 0.0
        %550 = vmatpush1.msra.mxu0 %v511
        %551 = vmatprep.subr.mxu0 0.0
        %552 = vmatpush1.msra.mxu0 %v510
        %553 = vmatprep.subr.mxu0 0.0
        %554 = vmatpush1.msra.mxu0 %v509
        %555 = vmatprep.subr.mxu0 0.0
        %556 = vmatpush2.msra.mxu0 0.0
        %557 = vmatprep.subr.mxu0 0.0
        %558 = vmatpush2.msra.mxu0 0.0
        %559 = vmatprep.subr.mxu0 0.0
        %560 = vmatpush2.msra.mxu0 0.0
        %561 = vmatprep.subr.mxu0 0.0
        %562 = vmatpush2.msra.mxu0 0.0
        %563 = vmatprep.subr.mxu0 0.0
        %564 = vmatpush2.msra.mxu0 0.0
        %565 = vmatprep.subr.mxu0 0.0
        %566 = vmatpush2.msra.mxu0 0.0
        %567 = vmatprep.subr.mxu0 0.0
        %568 = vmatpush2.msra.mxu0 0.0
        %569 = vmatprep.subr.mxu0 0.0
        %570 = vmatpush2.msra.mxu0 0.0
        %571 = vmatprep.subr.mxu0 0.0
        %572 = vmatpush2.msra.mxu0 0.0
        %573 = vmatprep.subr.mxu0 0.0
        %574 = vmatpush2.msra.mxu0 0.0
        %575 = vmatprep.subr.mxu0 0.0
        %576 = vmatpush2.msra.mxu0 0.0
        %577 = vmatprep.subr.mxu0 0.0
        %578 = vmatpush2.msra.mxu0 0.0
        %579 = vmatprep.subr.mxu0 0.0
        %580 = vmatpush2.msra.mxu0 0.0
        %581 = vmatprep.subr.mxu0 0.0
        %582 = vmatpush2.msra.mxu0 0.0
        %583 = vmatprep.subr.mxu0 0.0
        %584 = vmatpush2.msra.mxu0 0.0
        %585 = vmatprep.subr.mxu0 0.0
        %586 = vmatpush2.msra.mxu0 0.0
        %587 = vmatprep.mubr.f32.mxu0 0.0
        %588 = vmatmul.mubr.f32.gmra.mxu0 %v521
        %v589 = vpop.f32.mrf.mxu0
        %v590 = vadd.f32 %v518, %v589
        %v591 = vpop.f32.mrf.mxu0
        %592 = vdwg.mxu0
        %v593 = vmax.f32 %v590, 0.0
        %v594 = vld [vmem:[#allocation8] sm:$0xff]
        %v595 = vld [vmem:[#allocation8 + $0x8] sm:$0xff]
        %v596 = vld [vmem:[#allocation8 + $0x10] sm:$0xff]
        %v597 = vld [vmem:[#allocation8 + $0x18] sm:$0xff]
        %v598 = vld [vmem:[%s8] sm:$0x1]
        %v600 = vlaneseq
        %v601 = vshrl.u32 %v600, 7
        %v602 = vsub.s32 0, %v601
        %v603 = vrot.slane %v598, %v602
        %v606 = vsel %vm393, %v593, 0
        %608 = vmatprep.subr.mxu0 0.0
        %609 = vmatpush1.msra.mxu0 0.0
        %610 = vmatprep.subr.mxu0 0.0
        %611 = vmatpush1.msra.mxu0 0.0
        %612 = vmatprep.subr.mxu0 0.0
        %613 = vmatpush1.msra.mxu0 0.0
        %614 = vmatprep.subr.mxu0 0.0
        %615 = vmatpush1.msra.mxu0 0.0
        %616 = vmatprep.subr.mxu0 0.0
        %617 = vmatpush1.msra.mxu0 0.0
        %618 = vmatprep.subr.mxu0 0.0
        %619 = vmatpush1.msra.mxu0 0.0
        %620 = vmatprep.subr.mxu0 0.0
        %621 = vmatpush1.msra.mxu0 0.0
        %622 = vmatprep.subr.mxu0 0.0
        %623 = vmatpush1.msra.mxu0 0.0
        %624 = vmatprep.subr.mxu0 0.0
        %625 = vmatpush1.msra.mxu0 0.0
        %626 = vmatprep.subr.mxu0 0.0
        %627 = vmatpush1.msra.mxu0 0.0
        %628 = vmatprep.subr.mxu0 0.0
        %629 = vmatpush1.msra.mxu0 0.0
        %630 = vmatprep.subr.mxu0 0.0
        %631 = vmatpush1.msra.mxu0 0.0
        %632 = vmatprep.subr.mxu0 0.0
        %633 = vmatpush1.msra.mxu0 %v597
        %634 = vmatprep.subr.mxu0 0.0
        %635 = vmatpush1.msra.mxu0 %v596
        %636 = vmatprep.subr.mxu0 0.0
        %637 = vmatpush1.msra.mxu0 %v595
        %638 = vmatprep.subr.mxu0 0.0
        %639 = vmatpush1.msra.mxu0 %v594
        %640 = vmatprep.subr.mxu0 0.0
        %641 = vmatpush2.msra.mxu0 0.0
        %642 = vmatprep.subr.mxu0 0.0
        %643 = vmatpush2.msra.mxu0 0.0
        %644 = vmatprep.subr.mxu0 0.0
        %645 = vmatpush2.msra.mxu0 0.0
        %646 = vmatprep.subr.mxu0 0.0
        %647 = vmatpush2.msra.mxu0 0.0
        %648 = vmatprep.subr.mxu0 0.0
        %649 = vmatpush2.msra.mxu0 0.0
        %650 = vmatprep.subr.mxu0 0.0
        %651 = vmatpush2.msra.mxu0 0.0
        %652 = vmatprep.subr.mxu0 0.0
        %653 = vmatpush2.msra.mxu0 0.0
        %654 = vmatprep.subr.mxu0 0.0
        %655 = vmatpush2.msra.mxu0 0.0
        %656 = vmatprep.subr.mxu0 0.0
        %657 = vmatpush2.msra.mxu0 0.0
        %658 = vmatprep.subr.mxu0 0.0
        %659 = vmatpush2.msra.mxu0 0.0
        %660 = vmatprep.subr.mxu0 0.0
        %661 = vmatpush2.msra.mxu0 0.0
        %662 = vmatprep.subr.mxu0 0.0
        %663 = vmatpush2.msra.mxu0 0.0
        %664 = vmatprep.subr.mxu0 0.0
        %665 = vmatpush2.msra.mxu0 0.0
        %666 = vmatprep.subr.mxu0 0.0
        %667 = vmatpush2.msra.mxu0 0.0
        %668 = vmatprep.subr.mxu0 0.0
        %669 = vmatpush2.msra.mxu0 0.0
        %670 = vmatprep.subr.mxu0 0.0
        %671 = vmatpush2.msra.mxu0 0.0
        %672 = vmatprep.mubr.f32.mxu0 0.0
        %673 = vmatmul.mubr.f32.gmra.mxu0 %v606
        %v674 = vpop.f32.mrf.mxu0
        %v675 = vadd.f32 %v603, %v674
        %v676 = vpop.f32.mrf.mxu0
        %677 = vdwg.mxu0
        %678 = vst [vmem:[%s391] sm:$0xff] %v675
        %s679 = sand.u32 %s230, 1
        %s680 = scalar_lea.sflag [#allocation4], %s679
        %s681 = sand.u32 %s230, 1
        %s682 = smul.addr %s681, 8
        %s683 = scalar_lea.vmem [#allocation10], %s682
        // Predicated region
        $region73: #{tpu_custom_call.1} parent=55 // pred_check
          %p684 = pneg %p240
        $region74: #{tpu_custom_call.1} parent=55 // pred_check_branch
          %686 = sbr.rel (%p684) target = $region76
        $region75: #{tpu_custom_call.1} parent=55 // pred_region
          %s688 = ssub.s32 128, 128
          %689 = vsyncadd %s680, %s688
          %s690 = smul.addr %s28, 128
          %s691 = scalar_lea.hbm %s9, %s690
          %s693 = sshll.u32 %s683, 4
          %s694 = int_to_ptr.vmem [resolvable:$true] %s693
          %696 = dma.vmem_to_hbm [thread:$0]  %s694, 128, %s691, %s680
        $region76: #{tpu_custom_call.1} parent=55 // pred_fallthru
          _
      $region56: #{tpu_custom_call.1} parent=5 // pred_fallthru
        _
      %p697 = scmp.le.s32.totalorder 2, %s23
      // Predicated region
      $region77: #{tpu_custom_call.1} parent=5 // pred_check
        %p698 = pneg %p697
      $region78: #{tpu_custom_call.1} parent=5 // pred_check_branch
        %700 = sbr.rel (%p698) target = $region80
      $region79: #{tpu_custom_call.1} parent=5 // pred_region
        %s701 = ssub.s32 %s23, 2
        // Predicated region
        $region81: #{tpu_custom_call.1} parent=79 // pred_check
          %p702 = pneg %p246
        $region82: #{tpu_custom_call.1} parent=79 // pred_check_branch
          %704 = sbr.rel (%p702) target = $region84
        $region83: #{tpu_custom_call.1} parent=79 // pred_region
          %s705 = sand.u32 %s231, 1
          %s706 = scalar_lea.sflag [#allocation4], %s705
          %s707 = sand.u32 %s231, 1
          %s708 = smul.addr %s707, 8
          %s709 = scalar_lea.vmem [#allocation10], %s708
          %710 = dma.done %s706, 128
        $region84: #{tpu_custom_call.1} parent=79 // pred_fallthru
          _
      $region80: #{tpu_custom_call.1} parent=5 // pred_fallthru
        _
    $region6: #{tpu_custom_call.1} parent=1 // loop_footer
      %s27 = sadd.s32 1, %s23
    $region7: #{tpu_custom_call.1} parent=1 // loop_footer_branch
      %22 = sbr.rel target = $region3
    $region8: #{tpu_custom_call.1} parent=1 // loop_exit
      _
    %711 = vsyncpa [#allocation3], 1
    %s712 = scalar_lea.sflag [#allocation3], 1
    %713 = vsyncpa %s712, 1
    %714 = vsyncpa [#allocation6], 1
    %715 = vsyncpa [#allocation9], 1
    %716 = vsyncpa [#allocation4], 1
    %s717 = scalar_lea.sflag [#allocation4], 1
    %718 = vsyncpa %s717, 1

</llo_original>
